<compile_context>
chip_gen: v5e
topology: v5e:2x2
jax: 0.10.0
libtpu: 0.0.40
codegen_flags: <defaults>
</compile_context>

<pallas_src>
import numpy as np

import jax
import jax.numpy as jnp
from jax.experimental import pallas as pl
from jax.experimental.pallas import tpu as pltpu

_MIB = 1024 * 1024

# Single-buffer grid-invariant operands (constant index_map => the second
# pipeline buffer is pure VMEM waste; Wr alone is C*C*2 bytes per buffer).
_SINGLE_BUF = dict(pipeline_mode=pl.Buffered(1)) if hasattr(pl, "Buffered") else {}


def _tpu_generation():
    try:
        kind = jax.devices()[0].device_kind.lower()
    except Exception:
        return "unknown"
    if "v7" in kind:
        return "v7x"
    if "v6" in kind:
        return "v6e"
    if "v5" in kind:
        return "v5"
    return "unknown"


def _pick_tile(total, target, quantum=8):
    """Largest divisor of `total` that is <= target and a multiple of `quantum`
    (or the full extent)."""
    target = max(1, min(int(target), int(total)))
    for cand in range(target, 0, -1):
        if total % cand == 0 and (cand % quantum == 0 or cand == total):
            return cand
    return total


# ----------------------------------------------------------------------------
# Kernels
# ----------------------------------------------------------------------------
def _rwkv_cm_resident_kernel(x_ref, xx_ref, tmk_ref, tmr_ref,
                             wk_ref, wv_ref, wr_ref, o_ref):
    """Weights fully VMEM-resident: one body per (b, t) tile."""
    x = x_ref[0].astype(jnp.float32)          # (T_tile, C)
    xx = xx_ref[0].astype(jnp.float32)        # (T_tile, C), pre-shifted in time
    tmk = tmk_ref[...]                        # (1, C) f32, broadcasts over T
    tmr = tmr_ref[...]                        # (1, C) f32

    xk = (x * tmk + xx * (1.0 - tmk)).astype(jnp.bfloat16)
    xr = (x * tmr + xx * (1.0 - tmr)).astype(jnp.bfloat16)

    k = jnp.dot(xk, wk_ref[...], preferred_element_type=jnp.float32)
    silu_k = (k * jax.nn.sigmoid(k)).astype(jnp.bfloat16)        # F.silu, f32 math
    kv = jnp.dot(silu_k, wv_ref[...], preferred_element_type=jnp.float32)

    r = jnp.dot(xr, wr_ref[...], preferred_element_type=jnp.float32)
    o_ref[0] = (jax.nn.sigmoid(r) * kv).astype(o_ref.dtype)


def _rwkv_cm_streamed_kernel(x_ref, xx_ref, tmk_ref, tmr_ref, wk_ref, wv_ref,
                             wr_ref, o_ref, xk_sc, sr_sc, kv_acc):
    """Large-C path: Wk/Wv streamed along an innermost 'arbitrary' H axis."""
    h = pl.program_id(2)

    # ---- per-(b, t)-tile prologue: done once, not once per H tile ----------
    @pl.when(h == 0)
    def _():
        x = x_ref[0].astype(jnp.float32)
        xx = xx_ref[0].astype(jnp.float32)
        tmk = tmk_ref[...]
        tmr = tmr_ref[...]
        xk_sc[...] = (x * tmk + xx * (1.0 - tmk)).astype(jnp.bfloat16)
        xr = (x * tmr + xx * (1.0 - tmr)).astype(jnp.bfloat16)
        r = jnp.dot(xr, wr_ref[...], preferred_element_type=jnp.float32)
        sr_sc[...] = jax.nn.sigmoid(r)       # receptance gate, f32
        kv_acc[...] = jnp.zeros_like(kv_acc)

    # ---- fused key -> silu -> value over the current H tile ----------------
    k = jnp.dot(xk_sc[...], wk_ref[...], preferred_element_type=jnp.float32)
    silu_k = (k * jax.nn.sigmoid(k)).astype(jnp.bfloat16)
    kv_acc[...] += jnp.dot(silu_k, wv_ref[...], preferred_element_type=jnp.float32)

    # ---- epilogue: apply gate, single lane-dense store of the output tile --
    @pl.when(h == pl.num_programs(2) - 1)
    def _():
        o_ref[0] = (sr_sc[...] * kv_acc[...]).astype(o_ref.dtype)


# ----------------------------------------------------------------------------
# Wrapper
# ----------------------------------------------------------------------------
def rwkv_cm_forward(x, time_mix_k, time_mix_r, w_key, w_value, w_r,
                    *, out_dtype=None, t_tile=None, h_tile=None):
    """x: (B, T, C); time_mix_*: (1, C); w_key: (C, 4C); w_value: (4C, C); w_r: (C, C)."""
    B, T, C = x.shape
    H = w_key.shape[1]
    out_dtype = x.dtype if out_dtype is None else out_dtype

    # ---- generation-gated budgets ------------------------------------------
    gen = _tpu_generation()
    if gen == "v6e":
        vmem_limit = 100 * _MIB          # 128 MiB physical
        resident_weight_budget = 44 * _MIB
        t_target, h_target = 1024, 1024  # ridge ~650 flop/byte -> big t tiles
    elif gen == "v5":
        vmem_limit = 100 * _MIB          # 128 MiB physical; scoped default is 16
        resident_weight_budget = 44 * _MIB
        t_target, h_target = 512, 1024   # ridge ~240 flop/byte
    else:                                # v7x (or unknown): only 64 MiB VMEM/core
        vmem_limit = 56 * _MIB
        resident_weight_budget = 20 * _MIB
        t_target, h_target = 512, 512    # ridge ~310 flop/byte

    wkv_bytes = 2 * (C * H + H * C)      # bf16 key + value weights
    wr_bytes = 2 * C * C                 # bf16 receptance weight
    resident = (wkv_bytes + wr_bytes) <= resident_weight_budget
    if resident:
        # k intermediate is (t_tile, H) f32 in the resident body; keep it modest.
        t_target = min(t_target, 512)

    # ---- tile selection ------------------------------------------------------
    if t_tile is None:
        t_tile = _pick_tile(T, t_target, quantum=8)
    else:
        t_tile = _pick_tile(T, t_tile, quantum=8)
    # Keep >= 2 parallel grid steps so v7x's two TensorCores both get work.
    if B * (T // t_tile) < 2:
        smaller = _pick_tile(T, max(1, t_tile // 2), quantum=8)
        if T // smaller >= 2:
            t_tile = smaller
    if h_tile is None:
        h_tile = _pick_tile(H, h_target, quantum=128)
    else:
        h_tile = _pick_tile(H, h_tile, quantum=128)

    # ---- operand prep --------------------------------------------------------
    # bf16 activations: half the HBM traffic / VMEM footprint; mix math is
    # re-done in f32 inside the kernel.
    xb = x.astype(jnp.bfloat16)
    # Time shift done once in the wrapper so T-tiling needs no halo.
    # TODO(synk): carry the previous T-tile's last row in VMEM scratch instead of
    # materializing xx in HBM (saves one (B,T,C) bf16 write+read).
    xxb = jnp.pad(xb, ((0, 0), (1, 0), (0, 0)))[:, :-1, :]

    wk = w_key.astype(jnp.bfloat16)
    wv = w_value.astype(jnp.bfloat16)
    wr = w_r.astype(jnp.bfloat16)
    tmk = time_mix_k.astype(jnp.float32).reshape(1, C)
    tmr = time_mix_r.astype(jnp.float32).reshape(1, C)

    # ---- honest cost estimate ------------------------------------------------
    n_bt = B * (T // t_tile)
    out_bytes = B * T * C * np.dtype(out_dtype).itemsize
    weight_traffic = (wkv_bytes + wr_bytes) if resident \
        else (wkv_bytes * n_bt + wr_bytes)      # Wk/Wv re-streamed per (b,t) tile
    cost = pl.CostEstimate(
        flops=int(2 * B * T * (2 * C * H + C * C)),
        transcendentals=int(B * T * (H + C)),
        bytes_accessed=int(2 * B * T * C * 2 + out_bytes + weight_traffic
                           + 2 * C * 4 * 2),
    )

    out_shape = jax.ShapeDtypeStruct((B, T, C), out_dtype)

    if resident:
        # Weights DMA'd from HBM exactly once; grid is purely parallel.
        grid_spec = pltpu.PrefetchScalarGridSpec(
            num_scalar_prefetch=0,
            grid=(B, T // t_tile),
            in_specs=[
                pl.BlockSpec((1, t_tile, C), lambda b, t: (b, t, 0)),          # x
                pl.BlockSpec((1, t_tile, C), lambda b, t: (b, t, 0)),          # xx
                pl.BlockSpec((1, C), lambda b, t: (0, 0), **_SINGLE_BUF),      # time_mix_k
                pl.BlockSpec((1, C), lambda b, t: (0, 0), **_SINGLE_BUF),      # time_mix_r
                pl.BlockSpec((C, H), lambda b, t: (0, 0), **_SINGLE_BUF),      # key W
                pl.BlockSpec((H, C), lambda b, t: (0, 0), **_SINGLE_BUF),      # value W
                pl.BlockSpec((C, C), lambda b, t: (0, 0), **_SINGLE_BUF),      # r W
            ],
            out_specs=pl.BlockSpec((1, t_tile, C), lambda b, t: (b, t, 0)),
        )
        return pl.pallas_call(
            _rwkv_cm_resident_kernel,
            out_shape=out_shape,
            grid_spec=grid_spec,
            compiler_params=pltpu.CompilerParams(
                dimension_semantics=("parallel", "parallel"),
                vmem_limit_bytes=vmem_limit),
            cost_estimate=cost,
        )(xb, xxb, tmk, tmr, wk, wv, wr)

    # Streamed path: H is the innermost "arbitrary" reduction axis; scratch
    # (xk / gate / kv accumulator) is resident across it.
    grid_spec = pltpu.PrefetchScalarGridSpec(
        num_scalar_prefetch=0,
        grid=(B, T // t_tile, H // h_tile),
        in_specs=[
            pl.BlockSpec((1, t_tile, C), lambda b, t, h: (b, t, 0)),           # x
            pl.BlockSpec((1, t_tile, C), lambda b, t, h: (b, t, 0)),           # xx
            pl.BlockSpec((1, C), lambda b, t, h: (0, 0), **_SINGLE_BUF),       # time_mix_k
            pl.BlockSpec((1, C), lambda b, t, h: (0, 0), **_SINGLE_BUF),       # time_mix_r
            pl.BlockSpec((C, h_tile), lambda b, t, h: (0, h)),                 # key W tile
            pl.BlockSpec((h_tile, C), lambda b, t, h: (h, 0)),                 # value W tile
            pl.BlockSpec((C, C), lambda b, t, h: (0, 0), **_SINGLE_BUF),       # r W
        ],
        out_specs=pl.BlockSpec((1, t_tile, C), lambda b, t, h: (b, t, 0)),
        scratch_shapes=[
            pltpu.VMEM((t_tile, C), jnp.bfloat16),   # xk (MXU operand)
            pltpu.VMEM((t_tile, C), jnp.float32),    # sigmoid(r) gate
            pltpu.VMEM((t_tile, C), jnp.float32),    # kv accumulator
        ],
    )
    return pl.pallas_call(
        _rwkv_cm_streamed_kernel,
        out_shape=out_shape,
        grid_spec=grid_spec,
        compiler_params=pltpu.CompilerParams(
            dimension_semantics=("parallel", "parallel", "arbitrary"),
            vmem_limit_bytes=vmem_limit),
        cost_estimate=cost,
    )(xb, xxb, tmk, tmr, wk, wv, wr)


# ----------------------------------------------------------------------------
# Pure-JAX reference (mirrors the kernel's bf16 operand casts)
# ----------------------------------------------------------------------------
def rwkv_cm_reference(x, time_mix_k, time_mix_r, w_key, w_value, w_r):
    xb = x.astype(jnp.bfloat16).astype(jnp.float32)
    xx = jnp.pad(x.astype(jnp.bfloat16),
                 ((0, 0), (1, 0), (0, 0)))[:, :-1, :].astype(jnp.float32)
    xk = (xb * time_mix_k + xx * (1.0 - time_mix_k)).astype(jnp.bfloat16)
    xr = (xb * time_mix_r + xx * (1.0 - time_mix_r)).astype(jnp.bfloat16)
    k = jnp.dot(xk, w_key.astype(jnp.bfloat16), preferred_element_type=jnp.float32)
    silu_k = (k * jax.nn.sigmoid(k)).astype(jnp.bfloat16)
    kv = jnp.dot(silu_k, w_value.astype(jnp.bfloat16),
                 preferred_element_type=jnp.float32)
    sr = jax.nn.sigmoid(
        jnp.dot(xr, w_r.astype(jnp.bfloat16), preferred_element_type=jnp.float32))
    return sr * kv


if __name__ == "__main__":
    # Small shapes consistent with the module: batch=2, seq=8, hidden=32.
    B, T, C = 2, 8, 32
    H = 4 * C                       # h_up = hidden_size * 4
    layers, index = 8, 2            # RWKVConfig.number_of_layers, layer index

    # Deterministic parameter init mirroring the module's __init__ (synthetic).
    time_ratio = 1.0 - index / layers
    ramp = (jnp.arange(C, dtype=jnp.float32) / C)[None, :]      # (1, C)
    time_mix_k = jnp.power(ramp, time_ratio)
    time_mix_r = jnp.power(ramp, time_ratio)

    key = jax.random.PRNGKey(0)
    kx, kk, kv_, kr = jax.random.split(key, 4)
    x = jax.random.normal(kx, (B, T, C), dtype=jnp.float32)
    # nn.Linear weights, stored already transposed as (in_features, out_features)
    w_key = jax.random.normal(kk, (C, H), dtype=jnp.float32) * 0.05
    w_value = jax.random.normal(kv_, (H, C), dtype=jnp.float32) * 0.05
    w_r = jax.random.normal(kr, (C, C), dtype=jnp.float32) * 0.05

    out = rwkv_cm_forward(x, time_mix_k, time_mix_r, w_key, w_value, w_r)
    out = jax.block_until_ready(out)

    ref = rwkv_cm_reference(x, time_mix_k, time_mix_r, w_key, w_value, w_r)
    assert out.shape == (B, T, C)
    # bf16 MXU operands -> compare against the bf16-aware reference, moderate tol.
    assert jnp.allclose(out, ref, atol=1e-2, rtol=1e-2), float(jnp.max(jnp.abs(out - ref)))

    print("KERNEL_OK")
</pallas_src>

<mosaic_0001>
module attributes {stable_mosaic.version = 11 : i64} {
  func.func @_rwkv_cm_resident_kernel(%arg0: i32, %arg1: i32, %arg2: memref<1x8x32xbf16, #tpu.memory_space<vmem>>, %arg3: memref<1x8x32xbf16, #tpu.memory_space<vmem>>, %arg4: memref<1x32xf32, #tpu.memory_space<vmem>>, %arg5: memref<1x32xf32, #tpu.memory_space<vmem>>, %arg6: memref<32x128xbf16, #tpu.memory_space<vmem>>, %arg7: memref<128x32xbf16, #tpu.memory_space<vmem>>, %arg8: memref<32x32xbf16, #tpu.memory_space<vmem>>, %arg9: memref<1x8x32xf32, #tpu.memory_space<vmem>>) attributes {dimension_semantics = [#tpu.dimension_semantics<parallel>, #tpu.dimension_semantics<parallel>], iteration_bounds = array<i64: 2, 1>, scalar_prefetch = 0 : i64, scratch_operands = 0 : i64, tpu.core_type = #tpu.core_type<tc>, window_params = [{transform_indices = @transform_0, window_bounds = array<i64: 1, 8, 32>}, {transform_indices = @transform_1, window_bounds = array<i64: 1, 8, 32>}, {pipeline_mode = #tpu.pipeline_mode<synchronous>, transform_indices = @transform_2, window_bounds = array<i64: 1, 32>}, {pipeline_mode = #tpu.pipeline_mode<synchronous>, transform_indices = @transform_3, window_bounds = array<i64: 1, 32>}, {pipeline_mode = #tpu.pipeline_mode<synchronous>, transform_indices = @transform_4, window_bounds = array<i64: 32, 128>}, {pipeline_mode = #tpu.pipeline_mode<synchronous>, transform_indices = @transform_5, window_bounds = array<i64: 128, 32>}, {pipeline_mode = #tpu.pipeline_mode<synchronous>, transform_indices = @transform_6, window_bounds = array<i64: 32, 32>}, {transform_indices = @transform_7, window_bounds = array<i64: 1, 8, 32>}]} {
    %c0 = arith.constant 0 : index
    %c0_0 = arith.constant 0 : index
    %c0_1 = arith.constant 0 : index
    %0 = vector.load %arg2[%c0, %c0_0, %c0_1] : memref<1x8x32xbf16, #tpu.memory_space<vmem>>, vector<1x8x32xbf16>
    %1 = vector.shape_cast %0 : vector<1x8x32xbf16> to vector<8x32xbf16>
    %2 = arith.extf %1 : vector<8x32xbf16> to vector<8x32xf32>
    %c0_2 = arith.constant 0 : index
    %c0_3 = arith.constant 0 : index
    %c0_4 = arith.constant 0 : index
    %3 = vector.load %arg3[%c0_2, %c0_3, %c0_4] : memref<1x8x32xbf16, #tpu.memory_space<vmem>>, vector<1x8x32xbf16>
    %4 = vector.shape_cast %3 : vector<1x8x32xbf16> to vector<8x32xbf16>
    %5 = arith.extf %4 : vector<8x32xbf16> to vector<8x32xf32>
    %c0_5 = arith.constant 0 : index
    %c0_6 = arith.constant 0 : index
    %6 = vector.load %arg4[%c0_5, %c0_6] : memref<1x32xf32, #tpu.memory_space<vmem>>, vector<1x32xf32>
    %c0_7 = arith.constant 0 : index
    %c0_8 = arith.constant 0 : index
    %7 = vector.load %arg5[%c0_7, %c0_8] : memref<1x32xf32, #tpu.memory_space<vmem>>, vector<1x32xf32>
    %8 = vector.broadcast %6 : vector<1x32xf32> to vector<8x32xf32>
    %9 = arith.mulf %2, %8 : vector<8x32xf32>
    %cst = arith.constant 1.000000e+00 : f32
    %10 = vector.broadcast %cst : f32 to vector<1x32xf32>
    %11 = arith.subf %10, %6 : vector<1x32xf32>
    %12 = vector.broadcast %11 : vector<1x32xf32> to vector<8x32xf32>
    %13 = arith.mulf %5, %12 : vector<8x32xf32>
    %14 = arith.addf %9, %13 : vector<8x32xf32>
    %15 = arith.truncf %14 : vector<8x32xf32> to vector<8x32xbf16>
    %16 = vector.broadcast %7 : vector<1x32xf32> to vector<8x32xf32>
    %17 = arith.mulf %2, %16 : vector<8x32xf32>
    %cst_9 = arith.constant 1.000000e+00 : f32
    %18 = vector.broadcast %cst_9 : f32 to vector<1x32xf32>
    %19 = arith.subf %18, %7 : vector<1x32xf32>
    %20 = vector.broadcast %19 : vector<1x32xf32> to vector<8x32xf32>
    %21 = arith.mulf %5, %20 : vector<8x32xf32>
    %22 = arith.addf %17, %21 : vector<8x32xf32>
    %23 = arith.truncf %22 : vector<8x32xf32> to vector<8x32xbf16>
    %c0_10 = arith.constant 0 : index
    %c0_11 = arith.constant 0 : index
    %24 = vector.load %arg6[%c0_10, %c0_11] : memref<32x128xbf16, #tpu.memory_space<vmem>>, vector<32x128xbf16>
    %cst_12 = arith.constant dense<0.000000e+00> : vector<8x128xf32>
    %25 = tpu.matmul %15, %24, %cst_12 {dimension_numbers = #tpu.dot_dimension_numbers<[1], [0], [0], [1], [0, 0, 1, 1], [], []>} : vector<8x32xbf16>, vector<32x128xbf16>, vector<8x128xf32> -> vector<8x128xf32>
    %26 = arith.negf %25 : vector<8x128xf32>
    %27 = math.exp %26 : vector<8x128xf32>
    %cst_13 = arith.constant 1.000000e+00 : f32
    %28 = vector.broadcast %cst_13 : f32 to vector<8x128xf32>
    %29 = arith.addf %28, %27 : vector<8x128xf32>
    %30 = arith.divf %28, %29 : vector<8x128xf32>
    %31 = arith.mulf %25, %30 : vector<8x128xf32>
    %32 = arith.truncf %31 : vector<8x128xf32> to vector<8x128xbf16>
    %c0_14 = arith.constant 0 : index
    %c0_15 = arith.constant 0 : index
    %33 = vector.load %arg7[%c0_14, %c0_15] : memref<128x32xbf16, #tpu.memory_space<vmem>>, vector<128x32xbf16>
    %cst_16 = arith.constant dense<0.000000e+00> : vector<8x32xf32>
    %34 = tpu.matmul %32, %33, %cst_16 {dimension_numbers = #tpu.dot_dimension_numbers<[1], [0], [0], [1], [0, 0, 1, 1], [], []>} : vector<8x128xbf16>, vector<128x32xbf16>, vector<8x32xf32> -> vector<8x32xf32>
    %c0_17 = arith.constant 0 : index
    %c0_18 = arith.constant 0 : index
    %35 = vector.load %arg8[%c0_17, %c0_18] : memref<32x32xbf16, #tpu.memory_space<vmem>>, vector<32x32xbf16>
    %cst_19 = arith.constant dense<0.000000e+00> : vector<8x32xf32>
    %36 = tpu.matmul %23, %35, %cst_19 {dimension_numbers = #tpu.dot_dimension_numbers<[1], [0], [0], [1], [0, 0, 1, 1], [], []>} : vector<8x32xbf16>, vector<32x32xbf16>, vector<8x32xf32> -> vector<8x32xf32>
    %37 = arith.negf %36 : vector<8x32xf32>
    %38 = math.exp %37 : vector<8x32xf32>
    %cst_20 = arith.constant 1.000000e+00 : f32
    %39 = vector.broadcast %cst_20 : f32 to vector<8x32xf32>
    %40 = arith.addf %39, %38 : vector<8x32xf32>
    %41 = arith.divf %39, %40 : vector<8x32xf32>
    %42 = arith.mulf %41, %34 : vector<8x32xf32>
    %c0_21 = arith.constant 0 : index
    %c0_22 = arith.constant 0 : index
    %c0_23 = arith.constant 0 : index
    %43 = vector.load %arg9[%c0_21, %c0_22, %c0_23] : memref<1x8x32xf32, #tpu.memory_space<vmem>>, vector<1x8x32xf32>
    %44 = vector.shape_cast %43 : vector<1x8x32xf32> to vector<8x32xf32>
    %45 = vector.shape_cast %42 : vector<8x32xf32> to vector<1x8x32xf32>
    tpu.vector_store %arg9[%c0_21, %c0_22, %c0_23], %45 {strides = array<i32>} : memref<1x8x32xf32, #tpu.memory_space<vmem>>, vector<1x8x32xf32>,
    return
  }
  func.func @transform_0(%arg0: i32, %arg1: i32) -> (i32, i32, i32) {
    %c0_i32 = arith.constant 0 : i32
    %c0_i32_0 = arith.constant 0 : i32
    return %arg0, %arg1, %c0_i32 : i32, i32, i32
  }
  func.func @transform_1(%arg0: i32, %arg1: i32) -> (i32, i32, i32) {
    %c0_i32 = arith.constant 0 : i32
    %c0_i32_0 = arith.constant 0 : i32
    return %arg0, %arg1, %c0_i32 : i32, i32, i32
  }
  func.func @transform_2(%arg0: i32, %arg1: i32) -> (i32, i32) {
    %c0_i32 = arith.constant 0 : i32
    %c0_i32_0 = arith.constant 0 : i32
    %c0_i32_1 = arith.constant 0 : i32
    return %c0_i32, %c0_i32_0 : i32, i32
  }
  func.func @transform_3(%arg0: i32, %arg1: i32) -> (i32, i32) {
    %c0_i32 = arith.constant 0 : i32
    %c0_i32_0 = arith.constant 0 : i32
    %c0_i32_1 = arith.constant 0 : i32
    return %c0_i32, %c0_i32_0 : i32, i32
  }
  func.func @transform_4(%arg0: i32, %arg1: i32) -> (i32, i32) {
    %c0_i32 = arith.constant 0 : i32
    %c0_i32_0 = arith.constant 0 : i32
    %c0_i32_1 = arith.constant 0 : i32
    return %c0_i32, %c0_i32_0 : i32, i32
  }
  func.func @transform_5(%arg0: i32, %arg1: i32) -> (i32, i32) {
    %c0_i32 = arith.constant 0 : i32
    %c0_i32_0 = arith.constant 0 : i32
    %c0_i32_1 = arith.constant 0 : i32
    return %c0_i32, %c0_i32_0 : i32, i32
  }
  func.func @transform_6(%arg0: i32, %arg1: i32) -> (i32, i32) {
    %c0_i32 = arith.constant 0 : i32
    %c0_i32_0 = arith.constant 0 : i32
    %c0_i32_1 = arith.constant 0 : i32
    return %c0_i32, %c0_i32_0 : i32, i32
  }
  func.func @transform_7(%arg0: i32, %arg1: i32) -> (i32, i32, i32) {
    %c0_i32 = arith.constant 0 : i32
    %c0_i32_0 = arith.constant 0 : i32
    return %arg0, %arg1, %c0_i32 : i32, i32, i32
  }
}

</mosaic_0001>

<llo_original>
// kernel: tpu_custom_call.1
$region0: #{tpu_custom_call.1}
  #allocation0 [shape = 'u32[]', space=smem, size = 0x4, offset = 0x4, fixed_abs, tag = 'smem constant byte address 0x4 - core index']
  #allocation1 [shape = 'u32[72,128]{1,0:T(1,128)}', space=vmem, size = 0x9000, scoped, tag = 'internal scratch']
  %s0 = inlined_call_operand.vmem [shape: bf16[2,8,32], index: 0, kind: input, shape index: {}]
  %s1 = inlined_call_operand.vmem [shape: bf16[2,8,32], index: 1, kind: input, shape index: {}]
  %s2 = inlined_call_operand.vmem [shape: f32[1,32], index: 2, kind: input, shape index: {}]
  %s3 = inlined_call_operand.vmem [shape: f32[1,32], index: 3, kind: input, shape index: {}]
  %s4 = inlined_call_operand.vmem [shape: bf16[32,128], index: 4, kind: input, shape index: {}]
  %s5 = inlined_call_operand.vmem [shape: bf16[128,32], index: 5, kind: input, shape index: {}]
  %s6 = inlined_call_operand.vmem [shape: bf16[32,32], index: 6, kind: input, shape index: {}]
  %s7 = inlined_call_operand.hbm [shape: f32[2,8,32], index: 7, kind: output, shape index: {}]
  %s8 = sld [smem:[#allocation0]]
  $region61: #{tpu_custom_call.1} parent=0
    _
  %s10 = ssub.s32 1, %s8
  %s11 = scalar_select 0, %s10, %s8
  $region1: #{tpu_custom_call.1} parent=0
    #allocation2 [shape = 'u8[8192]{0}', space=vmem, size = 0x2000, scoped, tag = 'output window, operand 0']
    #allocation3 [shape = 's32[2]{0}', space=sflag, size = 0x8, scoped, tag = 'scoped memory for tpu_custom_call.1']
    %12 = vsyncpa [#allocation3], 0
    %s13 = scalar_lea.sflag [#allocation3], 1
    %14 = vsyncpa %s13, 0
    loop: start=0, step=1, limit=4
    $region2: #{tpu_custom_call.1} parent=1 // loop_pre_header
      _
    $region3: #{tpu_custom_call.1} parent=1 // loop_header
      %s16 = sphi 0, %s20
      %p17 = scmp.ge.s32.totalorder %s16, 4
      %s23 = sphi 0, %s35
      %s24 = sphi 0, %s31
      %s25 = sphi 0, %s23
      %s26 = sphi 0, %s24
      %s27 = sphi 0, %s25
      %s28 = sphi 0, %s26
      %s40 = sphi 0, %s42
      %s43 = sphi 0, %s40
      %s44 = sphi 0, %s43
      %s60 = sphi 0, %s44
      %s68 = sphi 0, %s70
      %s71 = sphi 0, %s68
      %s72 = sphi 0, %s71
      %s88 = sphi 0, %s72
      %s92 = sphi 0, %s92
      %s94 = sphi 0, %s92
      %s95 = sphi 0, %s94
      %s109 = sphi 0, %s95
      %s113 = sphi 0, %s113
      %s115 = sphi 0, %s113
      %s116 = sphi 0, %s115
      %s130 = sphi 0, %s116
      %s134 = sphi 0, %s134
      %s136 = sphi 0, %s134
      %s137 = sphi 0, %s136
      %s151 = sphi 0, %s137
      %s155 = sphi 0, %s155
      %s157 = sphi 0, %s155
      %s158 = sphi 0, %s157
      %s172 = sphi 0, %s158
      %s176 = sphi 0, %s176
      %s178 = sphi 0, %s176
      %s179 = sphi 0, %s178
      %s193 = sphi 0, %s179
      %s201 = sphi 0, %s203
      %s204 = sphi 0, %s201
      %s205 = sphi 0, %s204
      %s221 = sphi 0, %s205
    $region4: #{tpu_custom_call.1} parent=1 // loop_header_branch
      %19 = sbr.rel (%p17) target = $region8
    $region5: #{tpu_custom_call.1} parent=1 // loop_body
      %s21 = ssub.s32 %s16, 1
      %s22 = ssub.s32 %s16, 2
      %s29 = sadd.s32 1, %s24
      %p30 = scmp.ge.s32.totalorder %s29, 1
      %s31 = scalar_select %p30, 0, %s29
      %s32 = sadd.s32 1, %s23
      %s33 = scalar_select %p30, %s32, %s23
      %p34 = scmp.ge.s32.totalorder %s33, 2
      %s35 = scalar_select %p34, 0, %s33
      %s36 = ssub.s32 %s23, %s35
      %s37 = ssub.s32 %s24, %s31
      %s38 = sor.u32 %s36, %s37
      %p39 = scmp.eq.s32.totalorder %s38, 0
      %s41 = sadd.s32 %s40, 1
      %s42 = scalar_select %p39, %s40, %s41
      %p45 = pneg %p39
      %p46 = scmp.eq.s32.totalorder %s16, 1
      %p47 = por %p45, %p46
      %p48 = scmp.ne.s32.totalorder %s40, %s43
      %p49 = scmp.eq.s32.totalorder %s16, 0
      %p50 = por %p48, %p49
      %p51 = scmp.ne.s32.totalorder %s40, %s43
      %p52 = scmp.eq.s32.totalorder %s21, 1
      %p53 = por %p51, %p52
      %p54 = scmp.ne.s32.totalorder %s43, %s44
      %p55 = scmp.eq.s32.totalorder %s21, 0
      %p56 = por %p54, %p55
      %p57 = scmp.ne.s32.totalorder %s43, %s44
      %p58 = scmp.eq.s32.totalorder %s22, 1
      %p59 = por %p57, %p58
      %p61 = scmp.ne.s32.totalorder %s44, %s60
      %p62 = scmp.eq.s32.totalorder %s22, 0
      %p63 = por %p61, %p62
      %s64 = ssub.s32 %s23, %s35
      %s65 = ssub.s32 %s24, %s31
      %s66 = sor.u32 %s64, %s65
      %p67 = scmp.eq.s32.totalorder %s66, 0
      %s69 = sadd.s32 %s68, 1
      %s70 = scalar_select %p67, %s68, %s69
      %p73 = pneg %p67
      %p74 = scmp.eq.s32.totalorder %s16, 1
      %p75 = por %p73, %p74
      %p76 = scmp.ne.s32.totalorder %s68, %s71
      %p77 = scmp.eq.s32.totalorder %s16, 0
      %p78 = por %p76, %p77
      %p79 = scmp.ne.s32.totalorder %s68, %s71
      %p80 = scmp.eq.s32.totalorder %s21, 1
      %p81 = por %p79, %p80
      %p82 = scmp.ne.s32.totalorder %s71, %s72
      %p83 = scmp.eq.s32.totalorder %s21, 0
      %p84 = por %p82, %p83
      %p85 = scmp.ne.s32.totalorder %s71, %s72
      %p86 = scmp.eq.s32.totalorder %s22, 1
      %p87 = por %p85, %p86
      %p89 = scmp.ne.s32.totalorder %s72, %s88
      %p90 = scmp.eq.s32.totalorder %s22, 0
      %p91 = por %p89, %p90
      %s93 = sadd.s32 %s92, 1
      %p96 = scmp.eq.s32.totalorder %s16, 1
      %p97 = scmp.ne.s32.totalorder %s92, %s94
      %p98 = scmp.eq.s32.totalorder %s16, 0
      %p99 = por %p97, %p98
      %p100 = scmp.ne.s32.totalorder %s92, %s94
      %p101 = scmp.eq.s32.totalorder %s21, 1
      %p102 = por %p100, %p101
      %p103 = scmp.ne.s32.totalorder %s94, %s95
      %p104 = scmp.eq.s32.totalorder %s21, 0
      %p105 = por %p103, %p104
      %p106 = scmp.ne.s32.totalorder %s94, %s95
      %p107 = scmp.eq.s32.totalorder %s22, 1
      %p108 = por %p106, %p107
      %p110 = scmp.ne.s32.totalorder %s95, %s109
      %p111 = scmp.eq.s32.totalorder %s22, 0
      %p112 = por %p110, %p111
      %s114 = sadd.s32 %s113, 1
      %p117 = scmp.eq.s32.totalorder %s16, 1
      %p118 = scmp.ne.s32.totalorder %s113, %s115
      %p119 = scmp.eq.s32.totalorder %s16, 0
      %p120 = por %p118, %p119
      %p121 = scmp.ne.s32.totalorder %s113, %s115
      %p122 = scmp.eq.s32.totalorder %s21, 1
      %p123 = por %p121, %p122
      %p124 = scmp.ne.s32.totalorder %s115, %s116
      %p125 = scmp.eq.s32.totalorder %s21, 0
      %p126 = por %p124, %p125
      %p127 = scmp.ne.s32.totalorder %s115, %s116
      %p128 = scmp.eq.s32.totalorder %s22, 1
      %p129 = por %p127, %p128
      %p131 = scmp.ne.s32.totalorder %s116, %s130
      %p132 = scmp.eq.s32.totalorder %s22, 0
      %p133 = por %p131, %p132
      %s135 = sadd.s32 %s134, 1
      %p138 = scmp.eq.s32.totalorder %s16, 1
      %p139 = scmp.ne.s32.totalorder %s134, %s136
      %p140 = scmp.eq.s32.totalorder %s16, 0
      %p141 = por %p139, %p140
      %p142 = scmp.ne.s32.totalorder %s134, %s136
      %p143 = scmp.eq.s32.totalorder %s21, 1
      %p144 = por %p142, %p143
      %p145 = scmp.ne.s32.totalorder %s136, %s137
      %p146 = scmp.eq.s32.totalorder %s21, 0
      %p147 = por %p145, %p146
      %p148 = scmp.ne.s32.totalorder %s136, %s137
      %p149 = scmp.eq.s32.totalorder %s22, 1
      %p150 = por %p148, %p149
      %p152 = scmp.ne.s32.totalorder %s137, %s151
      %p153 = scmp.eq.s32.totalorder %s22, 0
      %p154 = por %p152, %p153
      %s156 = sadd.s32 %s155, 1
      %p159 = scmp.eq.s32.totalorder %s16, 1
      %p160 = scmp.ne.s32.totalorder %s155, %s157
      %p161 = scmp.eq.s32.totalorder %s16, 0
      %p162 = por %p160, %p161
      %p163 = scmp.ne.s32.totalorder %s155, %s157
      %p164 = scmp.eq.s32.totalorder %s21, 1
      %p165 = por %p163, %p164
      %p166 = scmp.ne.s32.totalorder %s157, %s158
      %p167 = scmp.eq.s32.totalorder %s21, 0
      %p168 = por %p166, %p167
      %p169 = scmp.ne.s32.totalorder %s157, %s158
      %p170 = scmp.eq.s32.totalorder %s22, 1
      %p171 = por %p169, %p170
      %p173 = scmp.ne.s32.totalorder %s158, %s172
      %p174 = scmp.eq.s32.totalorder %s22, 0
      %p175 = por %p173, %p174
      %s177 = sadd.s32 %s176, 1
      %p180 = scmp.eq.s32.totalorder %s16, 1
      %p181 = scmp.ne.s32.totalorder %s176, %s178
      %p182 = scmp.eq.s32.totalorder %s16, 0
      %p183 = por %p181, %p182
      %p184 = scmp.ne.s32.totalorder %s176, %s178
      %p185 = scmp.eq.s32.totalorder %s21, 1
      %p186 = por %p184, %p185
      %p187 = scmp.ne.s32.totalorder %s178, %s179
      %p188 = scmp.eq.s32.totalorder %s21, 0
      %p189 = por %p187, %p188
      %p190 = scmp.ne.s32.totalorder %s178, %s179
      %p191 = scmp.eq.s32.totalorder %s22, 1
      %p192 = por %p190, %p191
      %p194 = scmp.ne.s32.totalorder %s179, %s193
      %p195 = scmp.eq.s32.totalorder %s22, 0
      %p196 = por %p194, %p195
      %s197 = ssub.s32 %s23, %s35
      %s198 = ssub.s32 %s24, %s31
      %s199 = sor.u32 %s197, %s198
      %p200 = scmp.eq.s32.totalorder %s199, 0
      %s202 = sadd.s32 %s201, 1
      %s203 = scalar_select %p200, %s201, %s202
      %p206 = pneg %p200
      %p207 = scmp.eq.s32.totalorder %s16, 1
      %p208 = por %p206, %p207
      %p209 = scmp.ne.s32.totalorder %s201, %s204
      %p210 = scmp.eq.s32.totalorder %s16, 0
      %p211 = por %p209, %p210
      %p212 = scmp.ne.s32.totalorder %s201, %s204
      %p213 = scmp.eq.s32.totalorder %s21, 1
      %p214 = por %p212, %p213
      %p215 = scmp.ne.s32.totalorder %s204, %s205
      %p216 = scmp.eq.s32.totalorder %s21, 0
      %p217 = por %p215, %p216
      %p218 = scmp.ne.s32.totalorder %s204, %s205
      %p219 = scmp.eq.s32.totalorder %s22, 1
      %p220 = por %p218, %p219
      %p222 = scmp.ne.s32.totalorder %s205, %s221
      %p223 = scmp.eq.s32.totalorder %s22, 0
      %p224 = por %p222, %p223
      %p225 = scmp.le.s32.totalorder 1, %s16
      %p226 = scmp.lt.s32.totalorder %s16, 3
      %p227 = pnand %p225, %p226
      %p228 = pneg %p227
      // Predicated region
      $region9: #{tpu_custom_call.1} parent=5 // pred_check
        _
      $region10: #{tpu_custom_call.1} parent=5 // pred_check_branch
        %230 = sbr.rel (%p227) target = $region12
      $region11: #{tpu_custom_call.1} parent=5 // pred_region
        %s231 = ssub.s32 %s16, 1
        // Predicated region
        $region13: #{tpu_custom_call.1} parent=11 // pred_check
          %p232 = pneg %p105
        $region14: #{tpu_custom_call.1} parent=11 // pred_check_branch
          %234 = sbr.rel (%p232) target = $region16
        $region15: #{tpu_custom_call.1} parent=11 // pred_region
          _
        $region16: #{tpu_custom_call.1} parent=11 // pred_fallthru
          _
        // Predicated region
        $region17: #{tpu_custom_call.1} parent=11 // pred_check
          %p235 = pneg %p126
        $region18: #{tpu_custom_call.1} parent=11 // pred_check_branch
          %237 = sbr.rel (%p235) target = $region20
        $region19: #{tpu_custom_call.1} parent=11 // pred_region
          _
        $region20: #{tpu_custom_call.1} parent=11 // pred_fallthru
          _
        // Predicated region
        $region21: #{tpu_custom_call.1} parent=11 // pred_check
          %p238 = pneg %p147
        $region22: #{tpu_custom_call.1} parent=11 // pred_check_branch
          %240 = sbr.rel (%p238) target = $region24
        $region23: #{tpu_custom_call.1} parent=11 // pred_region
          _
        $region24: #{tpu_custom_call.1} parent=11 // pred_fallthru
          _
        // Predicated region
        $region25: #{tpu_custom_call.1} parent=11 // pred_check
          %p241 = pneg %p168
        $region26: #{tpu_custom_call.1} parent=11 // pred_check_branch
          %243 = sbr.rel (%p241) target = $region28
        $region27: #{tpu_custom_call.1} parent=11 // pred_region
          _
        $region28: #{tpu_custom_call.1} parent=11 // pred_fallthru
          _
        // Predicated region
        $region29: #{tpu_custom_call.1} parent=11 // pred_check
          %p244 = pneg %p189
        $region30: #{tpu_custom_call.1} parent=11 // pred_check_branch
          %246 = sbr.rel (%p244) target = $region32
        $region31: #{tpu_custom_call.1} parent=11 // pred_region
          _
        $region32: #{tpu_custom_call.1} parent=11 // pred_fallthru
          _
      $region12: #{tpu_custom_call.1} parent=5 // pred_fallthru
        _
      %p247 = scmp.lt.s32.totalorder %s16, 2
      // Predicated region
      $region33: #{tpu_custom_call.1} parent=5 // pred_check
        %p248 = pneg %p247
      $region34: #{tpu_custom_call.1} parent=5 // pred_check_branch
        %250 = sbr.rel (%p248) target = $region36
      $region35: #{tpu_custom_call.1} parent=5 // pred_region
        // Predicated region
        $region37: #{tpu_custom_call.1} parent=35 // pred_check
          %p251 = pneg %p50
        $region38: #{tpu_custom_call.1} parent=35 // pred_check_branch
          %253 = sbr.rel (%p251) target = $region40
        $region39: #{tpu_custom_call.1} parent=35 // pred_region
          %p254 = scmp.lt.s32.totalorder %s23, 1
          %s255 = scalar_select %p254, %s23, 1
          %p256 = scmp.lt.s32.totalorder %s24, 0
          %s257 = scalar_select %p256, %s24, 0
          %s258 = sadd.s32 %s257, %s255
          %s259 = smul.addr %s258, 4
          %s260 = scalar_lea.vmem %s0, %s259
        $region40: #{tpu_custom_call.1} parent=35 // pred_fallthru
          _
        // Predicated region
        $region41: #{tpu_custom_call.1} parent=35 // pred_check
          %p261 = pneg %p78
        $region42: #{tpu_custom_call.1} parent=35 // pred_check_branch
          %263 = sbr.rel (%p261) target = $region44
        $region43: #{tpu_custom_call.1} parent=35 // pred_region
          %p264 = scmp.lt.s32.totalorder %s23, 1
          %s265 = scalar_select %p264, %s23, 1
          %p266 = scmp.lt.s32.totalorder %s24, 0
          %s267 = scalar_select %p266, %s24, 0
          %s268 = sadd.s32 %s267, %s265
          %s269 = smul.addr %s268, 4
          %s270 = scalar_lea.vmem %s1, %s269
        $region44: #{tpu_custom_call.1} parent=35 // pred_fallthru
          _
      $region36: #{tpu_custom_call.1} parent=5 // pred_fallthru
        _
      %p271 = scmp.le.s32.totalorder 1, %s16
      %p272 = scmp.lt.s32.totalorder %s16, 3
      %p273 = pnand %p271, %p272
      %p274 = pneg %p273
      // Predicated region
      $region45: #{tpu_custom_call.1} parent=5 // pred_check
        _
      $region46: #{tpu_custom_call.1} parent=5 // pred_check_branch
        %276 = sbr.rel (%p273) target = $region48
      $region47: #{tpu_custom_call.1} parent=5 // pred_region
        %s277 = ssub.s32 %s16, 1
        %p278 = scmp.lt.s32.totalorder %s25, 1
        %s279 = scalar_select %p278, %s25, 1
        %p280 = scmp.lt.s32.totalorder %s26, 0
        %s281 = scalar_select %p280, %s26, 0
        %s282 = sadd.s32 %s281, %s279
        %s283 = smul.addr %s282, 4
        %s284 = scalar_lea.vmem %s0, %s283
        %p285 = pneg %p56
        %p286 = pneg %p53
        %p287 = scmp.lt.s32.totalorder %s25, 1
        %s288 = scalar_select %p287, %s25, 1
        %p289 = scmp.lt.s32.totalorder %s26, 0
        %s290 = scalar_select %p289, %s26, 0
        %s291 = sadd.s32 %s290, %s288
        %s292 = smul.addr %s291, 4
        %s293 = scalar_lea.vmem %s1, %s292
        %p294 = pneg %p84
        %p295 = pneg %p81
        %p296 = pneg %p105
        %p297 = pneg %p102
        %p298 = pneg %p126
        %p299 = pneg %p123
        %p300 = pneg %p147
        %p301 = pneg %p144
        %p302 = pneg %p168
        %p303 = pneg %p165
        %p304 = pneg %p189
        %p305 = pneg %p186
        %p306 = pneg %p217
        %p307 = pneg %p214
        %s308 = sand.u32 %s204, 1
        %s309 = scalar_lea.sflag [#allocation3], %s308
        %s310 = sand.u32 %s204, 1
        %s311 = smul.addr %s310, 8
        %s312 = scalar_lea.vmem [#allocation2], %s311
        %p313 = scmp.lt.s32.totalorder %s25, 1
        %s314 = scalar_select %p313, %s25, 1
        %p315 = scmp.lt.s32.totalorder %s26, 0
        %s316 = scalar_select %p315, %s26, 0
        %s317 = sadd.s32 %s316, %s314
        %s318 = smul.addr %s317, 4
        %s319 = scalar_lea.vmem %s0, %s318
        %p320 = scmp.lt.s32.totalorder %s25, 1
        %s321 = scalar_select %p320, %s25, 1
        %p322 = scmp.lt.s32.totalorder %s26, 0
        %s323 = scalar_select %p322, %s26, 0
        %s324 = sadd.s32 %s323, %s321
        %s325 = smul.addr %s324, 4
        %s326 = scalar_lea.vmem %s1, %s325
        %v328 = vld [vmem:[%s319] sm:$0xf]
        %v329 = vunpack.c.l.bf16 %v328
        %v330 = vld [vmem:[%s326] sm:$0xf]
        %v331 = vunpack.c.l.bf16 %v330
        %v332 = vld [vmem:[%s2] sm:$0x1]
        %v333 = vld [vmem:[%s3] sm:$0x1]
        %v335 = vperm.slane %v332, 0
        %v337 = vmul.f32 %v329, %v335
        %v338 = vsub.f32 1.0, %v332
        %v340 = vperm.slane %v338, 0
        %v342 = vmul.f32 %v331, %v340
        %v343 = vadd.f32 %v337, %v342
        %v344 = vpack.c.bf16 %v343, %v343
        %v346 = vperm.slane %v333, 0
        %v348 = vmul.f32 %v329, %v346
        %v349 = vsub.f32 1.0, %v333
        %v351 = vperm.slane %v349, 0
        %v353 = vmul.f32 %v331, %v351
        %v354 = vadd.f32 %v348, %v353
        %v355 = vpack.c.bf16 %v354, %v354
        %v356 = vld [vmem:[%s4] sm:$0xf]
        %v357 = vld [vmem:[%s4 + $0x4] sm:$0xf]
        %v358 = vld [vmem:[%s4 + $0x8] sm:$0xf]
        %v359 = vld [vmem:[%s4 + $0xc] sm:$0xf]
        %v364 = vunpack.c.l.b16 %v356
        %v365 = vunpack.c.l.b16 %v357
        %v366 = vunpack.c.l.b16 %v358
        %v367 = vunpack.c.l.b16 %v359
        %v368 = vpack.c.b16 %v365, %v364
        %v369 = vpack.c.b16 %v367, %v366
        %vm372 = vcmask 261120
        %v374 = vsel %vm372, %v344, 0
        %376 = vmatpush.bf16.msra.mxu0 0
        %377 = vmatpush.bf16.msra.mxu0 0
        %378 = vmatpush.bf16.msra.mxu0 0
        %379 = vmatpush.bf16.msra.mxu0 0
        %380 = vmatpush.bf16.msra.mxu0 0
        %381 = vmatpush.bf16.msra.mxu0 0
        %382 = vmatpush.bf16.msra.mxu0 %v369
        %383 = vmatpush.bf16.msra.mxu0 %v368
        %384 = vmatmul.bf16.gmra.mxu0 %v374
        %v385 = vpop.f32.mrf.mxu0
        %v386 = vadd.f32 0.0, %v385
        %v387 = vpop.f32.mrf.mxu0
        %388 = vdwg.mxu0
        %v389 = vxor.u32 %v386, 2147483648
        %v390 = vmul.f32 %v389, 1.442695
        %v391 = vpow.pop %v390
        %v392 = vadd.f32 %v391, 1.0
        %v393 = vrcp.pop %v392
        %v394 = vmul.f32 %v392, %v393
        %v395 = vsub.f32 1.0, %v394
        %v396 = vmul.f32 %v393, %v395
        %v397 = vadd.f32 %v393, %v396
        %vm398 = vweird.f32 %v392
        %vm399 = vweird.f32 %v393
        %vm400 = vmor %vm398, %vm399
        %v401 = vsel %vm400, %v393, %v397
        %v402 = vand.u32 2147483647, %v392
        %vm403 = vcmp.eq.f32.partialorder %v402, 8.507059e+37
        %v404 = vand.u32 %v392, 2147483648
        %v405 = vor.u32 1.1754944e-38, %v404
        %v406 = vsel %vm403, %v405, %v401
        %v407 = vmul.f32 1.0, %v406
        %v408 = vmul.f32 %v386, %v407
        %v409 = vpack.c.bf16 %v408, %v408
        %v410 = vld [vmem:[%s5] sm:$0xf]
        %v411 = vld [vmem:[%s5 + $0x4] sm:$0xf]
        %v412 = vld [vmem:[%s5 + $0x8] sm:$0xf]
        %v413 = vld [vmem:[%s5 + $0xc] sm:$0xf]
        %v414 = vld [vmem:[%s5 + $0x10] sm:$0xf]
        %v415 = vld [vmem:[%s5 + $0x14] sm:$0xf]
        %v416 = vld [vmem:[%s5 + $0x18] sm:$0xf]
        %v417 = vld [vmem:[%s5 + $0x1c] sm:$0xf]
        %v418 = vld [vmem:[%s5 + $0x20] sm:$0xf]
        %v419 = vld [vmem:[%s5 + $0x24] sm:$0xf]
        %v420 = vld [vmem:[%s5 + $0x28] sm:$0xf]
        %v421 = vld [vmem:[%s5 + $0x2c] sm:$0xf]
        %v422 = vld [vmem:[%s5 + $0x30] sm:$0xf]
        %v423 = vld [vmem:[%s5 + $0x34] sm:$0xf]
        %v424 = vld [vmem:[%s5 + $0x38] sm:$0xf]
        %v425 = vld [vmem:[%s5 + $0x3c] sm:$0xf]
        %v442 = vunpack.c.l.b16 %v410
        %v443 = vunpack.c.l.b16 %v411
        %v444 = vunpack.c.l.b16 %v412
        %v445 = vunpack.c.l.b16 %v413
        %v446 = vunpack.c.l.b16 %v414
        %v447 = vunpack.c.l.b16 %v415
        %v448 = vunpack.c.l.b16 %v416
        %v449 = vunpack.c.l.b16 %v417
        %v450 = vunpack.c.l.b16 %v418
        %v451 = vunpack.c.l.b16 %v419
        %v452 = vunpack.c.l.b16 %v420
        %v453 = vunpack.c.l.b16 %v421
        %v454 = vunpack.c.l.b16 %v422
        %v455 = vunpack.c.l.b16 %v423
        %v456 = vunpack.c.l.b16 %v424
        %v457 = vunpack.c.l.b16 %v425
        %v458 = vpack.c.b16 %v443, %v442
        %v459 = vpack.c.b16 %v445, %v444
        %v460 = vpack.c.b16 %v447, %v446
        %v461 = vpack.c.b16 %v449, %v448
        %v462 = vpack.c.b16 %v451, %v450
        %v463 = vpack.c.b16 %v453, %v452
        %v464 = vpack.c.b16 %v455, %v454
        %v465 = vpack.c.b16 %v457, %v456
        %474 = vmatpush.bf16.msra.mxu0 %v465
        %475 = vmatpush.bf16.msra.mxu0 %v464
        %476 = vmatpush.bf16.msra.mxu0 %v463
        %477 = vmatpush.bf16.msra.mxu0 %v462
        %478 = vmatpush.bf16.msra.mxu0 %v461
        %479 = vmatpush.bf16.msra.mxu0 %v460
        %480 = vmatpush.bf16.msra.mxu0 %v459
        %481 = vmatpush.bf16.msra.mxu0 %v458
        %482 = vmatmul.bf16.gmra.mxu0 %v409
        %v483 = vpop.f32.mrf.mxu0
        %v484 = vadd.f32 0.0, %v483
        %v485 = vpop.f32.mrf.mxu0
        %486 = vdwg.mxu0
        %v487 = vld [vmem:[%s6] sm:$0xf]
        %v488 = vld [vmem:[%s6 + $0x4] sm:$0xf]
        %v489 = vld [vmem:[%s6 + $0x8] sm:$0xf]
        %v490 = vld [vmem:[%s6 + $0xc] sm:$0xf]
        %v495 = vunpack.c.l.b16 %v487
        %v496 = vunpack.c.l.b16 %v488
        %v497 = vunpack.c.l.b16 %v489
        %v498 = vunpack.c.l.b16 %v490
        %v499 = vpack.c.b16 %v496, %v495
        %v500 = vpack.c.b16 %v498, %v497
        %v504 = vsel %vm372, %v355, 0
        %506 = vmatpush.bf16.msra.mxu0 0
        %507 = vmatpush.bf16.msra.mxu0 0
        %508 = vmatpush.bf16.msra.mxu0 0
        %509 = vmatpush.bf16.msra.mxu0 0
        %510 = vmatpush.bf16.msra.mxu0 0
        %511 = vmatpush.bf16.msra.mxu0 0
        %512 = vmatpush.bf16.msra.mxu0 %v500
        %513 = vmatpush.bf16.msra.mxu0 %v499
        %514 = vmatmul.bf16.gmra.mxu0 %v504
        %v515 = vpop.f32.mrf.mxu0
        %v516 = vadd.f32 0.0, %v515
        %v517 = vpop.f32.mrf.mxu0
        %518 = vdwg.mxu0
        %v519 = vxor.u32 %v516, 2147483648
        %v520 = vmul.f32 %v519, 1.442695
        %v521 = vpow.pop %v520
        %v522 = vadd.f32 %v521, 1.0
        %v523 = vrcp.pop %v522
        %v524 = vmul.f32 %v522, %v523
        %v525 = vsub.f32 1.0, %v524
        %v526 = vmul.f32 %v523, %v525
        %v527 = vadd.f32 %v523, %v526
        %vm528 = vweird.f32 %v522
        %vm529 = vweird.f32 %v523
        %vm530 = vmor %vm528, %vm529
        %v531 = vsel %vm530, %v523, %v527
        %v532 = vand.u32 2147483647, %v522
        %vm533 = vcmp.eq.f32.partialorder %v532, 8.507059e+37
        %v534 = vand.u32 %v522, 2147483648
        %v535 = vor.u32 1.1754944e-38, %v534
        %v536 = vsel %vm533, %v535, %v531
        %v537 = vmul.f32 1.0, %v536
        %v538 = vmul.f32 %v537, %v484
        %539 = vst.msk [vmem:[%s312] sm:$0xff] %vm372, %v538
        %s540 = sand.u32 %s204, 1
        %s541 = scalar_lea.sflag [#allocation3], %s540
        %s542 = sand.u32 %s204, 1
        %s543 = smul.addr %s542, 8
        %s544 = scalar_lea.vmem [#allocation2], %s543
        // Predicated region
        $region49: #{tpu_custom_call.1} parent=47 // pred_check
          %p545 = pneg %p214
        $region50: #{tpu_custom_call.1} parent=47 // pred_check_branch
          %547 = sbr.rel (%p545) target = $region52
        $region51: #{tpu_custom_call.1} parent=47 // pred_region
          %549 = vsyncadd %s541, 0
          %s550 = sadd.s32 %s26, %s25
          %s551 = smul.addr %s550, 8
          %s552 = scalar_lea.hbm %s7, %s551
          %s554 = sshll.u32 %s544, 4
          %s555 = int_to_ptr.vmem [resolvable:$true] %s554
          %s556 = sshll.u32 %s552, 4
          %s557 = int_to_ptr.hbm [resolvable:$true] %s556
          %559 = dma.vmem_to_hbm [thread:$0]  %s555, 128, %s557, %s541
        $region52: #{tpu_custom_call.1} parent=47 // pred_fallthru
          _
      $region48: #{tpu_custom_call.1} parent=5 // pred_fallthru
        _
      %p560 = scmp.le.s32.totalorder 2, %s16
      // Predicated region
      $region53: #{tpu_custom_call.1} parent=5 // pred_check
        %p561 = pneg %p560
      $region54: #{tpu_custom_call.1} parent=5 // pred_check_branch
        %563 = sbr.rel (%p561) target = $region56
      $region55: #{tpu_custom_call.1} parent=5 // pred_region
        %s564 = ssub.s32 %s16, 2
        // Predicated region
        $region57: #{tpu_custom_call.1} parent=55 // pred_check
          %p565 = pneg %p220
        $region58: #{tpu_custom_call.1} parent=55 // pred_check_branch
          %567 = sbr.rel (%p565) target = $region60
        $region59: #{tpu_custom_call.1} parent=55 // pred_region
          %s568 = sand.u32 %s205, 1
          %s569 = scalar_lea.sflag [#allocation3], %s568
          %s570 = sand.u32 %s205, 1
          %s571 = smul.addr %s570, 8
          %s572 = scalar_lea.vmem [#allocation2], %s571
          %574 = dma.done %s569, 128
        $region60: #{tpu_custom_call.1} parent=55 // pred_fallthru
          _
      $region56: #{tpu_custom_call.1} parent=5 // pred_fallthru
        _
    $region6: #{tpu_custom_call.1} parent=1 // loop_footer
      %s20 = sadd.s32 1, %s16
    $region7: #{tpu_custom_call.1} parent=1 // loop_footer_branch
      %15 = sbr.rel target = $region3
    $region8: #{tpu_custom_call.1} parent=1 // loop_exit
      _
    %575 = vsyncpa [#allocation3], 1
    %s576 = scalar_lea.sflag [#allocation3], 1
    %577 = vsyncpa %s576, 1

</llo_original>
